<compile_context>
chip_gen: v5e
topology: v5e:2x2
jax: 0.10.0
libtpu: 0.0.40
codegen_flags: <defaults>
</compile_context>

<pallas_src>
import functools
import math

import jax
import jax.numpy as jnp
import numpy as np
from jax import lax
from jax.experimental import pallas as pl
from jax.experimental.pallas import tpu as pltpu

# leave headroom under v7x's 64 MiB physical VMEM (v5e/v6e have 128 MiB)
_VMEM_LIMIT_BYTES = 48 * 1024 * 1024
_ROW_TILE = 512          # M-tile for the linear projections (~85% of HBM roofline)
_L_TILE = 512            # query-rows tile for attention


# ---------------------------------------------------------------------------
# Pallas kernels
# ---------------------------------------------------------------------------
def _linear_posadd_kernel(x_ref, pe_ref, w_ref, b_ref, o_ref):
    # (x + pos_emb) @ W_t + b     — x/pe: (tm, K), w: (K, N), b: (1, N)
    x = x_ref[...] + pe_ref[...]
    acc = jnp.dot(x, w_ref[...], preferred_element_type=jnp.float32) + b_ref[...]
    o_ref[...] = acc.astype(o_ref.dtype)


def _kv_proj_kernel(k_ref, kpe_ref, v_ref, wk_ref, bk_ref, wv_ref, bv_ref,
                    ko_ref, vo_ref):
    # K = (key + pos_emb) @ Wk_t + bk ;  V = value @ Wv_t + bv   (fused, same M-grid)
    kx = k_ref[...] + kpe_ref[...]
    ko_ref[...] = (jnp.dot(kx, wk_ref[...], preferred_element_type=jnp.float32)
                   + bk_ref[...]).astype(ko_ref.dtype)
    vo_ref[...] = (jnp.dot(v_ref[...], wv_ref[...], preferred_element_type=jnp.float32)
                   + bv_ref[...]).astype(vo_ref.dtype)


def _attn_out_kernel(q_ref, k_ref, v_ref, wo_ref, bo_ref, o_ref, *,
                     num_heads, head_dim, scale):
    # one (batch, L-tile) step, ALL heads, with the W_o projection fused:
    #   q: (1, tl, E), k/v: (1, S, E), wo: (E, E), bo: (1, E), o: (1, tl, E)
    q = q_ref[0]                       # (tl, E)
    k = k_ref[0]                       # (S, E)
    v = v_ref[0]                       # (S, E)
    outs = []
    for h in range(num_heads):         # static, unrolled at trace time
        lo = h * head_dim
        qh = q[:, lo:lo + head_dim]
        kh = k[:, lo:lo + head_dim]
        vh = v[:, lo:lo + head_dim]
        # trans-B contraction on the last axes: no explicit k.T relayout
        s = lax.dot_general(qh, kh, (((1,), (1,)), ((), ())),
                            preferred_element_type=jnp.float32) * scale
        s = s - jnp.max(s, axis=-1, keepdims=True)
        p = jnp.exp(s)
        p = p * pl.reciprocal(jnp.sum(p, axis=-1, keepdims=True), approx=True)
        outs.append(jnp.dot(p.astype(vh.dtype), vh,
                            preferred_element_type=jnp.float32))
    # heads concatenated along the lane axis; W_o applied in-kernel so the
    # attention output never round-trips through HBM.
    attn = jnp.concatenate(outs, axis=-1).astype(q_ref.dtype)      # (tl, E)
    out = (jnp.dot(attn, wo_ref[...], preferred_element_type=jnp.float32)
           + bo_ref[...])
    o_ref[0] = out.astype(o_ref.dtype)                             # lane-dense store


# ---------------------------------------------------------------------------
# pallas_call wrappers
# ---------------------------------------------------------------------------
def q_proj_pallas(x2d, pe2d, w_t, b2d, *, tm=_ROW_TILE):
    """(x + pe) @ w_t + b.  x2d/pe2d: (M, K); w_t: (K, N); b2d: (1, N) -> (M, N)."""
    M, K = x2d.shape
    N = w_t.shape[1]
    tm = min(tm, M)                    # tm == M (full) or 512 (8-divisible)
    grid = (pl.cdiv(M, tm),)

    row = pl.BlockSpec((tm, K), lambda i: (i, 0))
    wsp = pl.BlockSpec((K, N), lambda i: (0, 0))      # weight slab stays resident
    bsp = pl.BlockSpec((1, N), lambda i: (0, 0))
    osp = pl.BlockSpec((tm, N), lambda i: (i, 0))

    return pl.pallas_call(
        _linear_posadd_kernel,
        out_shape=jax.ShapeDtypeStruct((M, N), x2d.dtype),
        grid=grid,
        in_specs=[row, row, wsp, bsp],
        out_specs=osp,
        compiler_params=pltpu.CompilerParams(
            dimension_semantics=("parallel",),
            vmem_limit_bytes=_VMEM_LIMIT_BYTES,
        ),
    )(x2d, pe2d, w_t, b2d)


def kv_proj_pallas(k2d, kpe2d, v2d, wk_t, bk2d, wv_t, bv2d, *, tm=_ROW_TILE):
    """Fused K and V projections over the same (B*S) row grid -> (K_out, V_out)."""
    M, K = k2d.shape
    N = wk_t.shape[1]
    tm = min(tm, M)
    grid = (pl.cdiv(M, tm),)

    row = pl.BlockSpec((tm, K), lambda i: (i, 0))
    wsp = pl.BlockSpec((K, N), lambda i: (0, 0))      # weight slabs stay resident
    bsp = pl.BlockSpec((1, N), lambda i: (0, 0))
    osp = pl.BlockSpec((tm, N), lambda i: (i, 0))

    return pl.pallas_call(
        _kv_proj_kernel,
        out_shape=(jax.ShapeDtypeStruct((M, N), k2d.dtype),
                   jax.ShapeDtypeStruct((M, N), v2d.dtype)),
        grid=grid,
        in_specs=[row, row, row, wsp, bsp, wsp, bsp],
        out_specs=(osp, osp),
        compiler_params=pltpu.CompilerParams(
            dimension_semantics=("parallel",),
            vmem_limit_bytes=_VMEM_LIMIT_BYTES,
        ),
    )(k2d, kpe2d, v2d, wk_t, bk2d, wv_t, bv2d)


def attention_out_pallas(q, k, v, wo_t, bo2d, *, num_heads, tl=_L_TILE):
    """q: (B, L, E), k/v: (B, S, E) -> W_o(attention) : (B, L, E)."""
    B, L, E = q.shape
    S = k.shape[1]
    head_dim = E // num_heads
    scale = 1.0 / math.sqrt(head_dim)
    tl = min(tl, L)
    grid = (B, pl.cdiv(L, tl))

    return pl.pallas_call(
        functools.partial(_attn_out_kernel, num_heads=num_heads,
                          head_dim=head_dim, scale=scale),
        out_shape=jax.ShapeDtypeStruct((B, L, E), q.dtype),
        grid=grid,
        in_specs=[
            pl.BlockSpec((1, tl, E), lambda b, lt: (b, lt, 0)),
            pl.BlockSpec((1, S, E), lambda b, lt: (b, 0, 0)),   # K resident over L-tiles
            pl.BlockSpec((1, S, E), lambda b, lt: (b, 0, 0)),   # V resident over L-tiles
            pl.BlockSpec((E, E), lambda b, lt: (0, 0)),         # W_o resident
            pl.BlockSpec((1, E), lambda b, lt: (0, 0)),
        ],
        out_specs=pl.BlockSpec((1, tl, E), lambda b, lt: (b, lt, 0)),
        compiler_params=pltpu.CompilerParams(
            dimension_semantics=("parallel", "parallel"),
            vmem_limit_bytes=_VMEM_LIMIT_BYTES,
        ),
    )(q, k, v, wo_t, bo2d)


# ---------------------------------------------------------------------------
# PositionalEmbedding2D table (buffer construction — glue)
# ---------------------------------------------------------------------------
def make_pe_table(model_dim, max_pos=1200, temperature=10000.0):
    assert model_dim % 4 == 0
    dim_pe = model_dim // 2
    positions = jnp.arange(max_pos, dtype=jnp.float32)[:, None]
    div_term = jnp.exp(
        jnp.arange(0, dim_pe, 2, dtype=jnp.float32)
        * -(jnp.log(jnp.float32(temperature)) / dim_pe)
    )
    pos = positions * div_term
    pe = jnp.zeros((max_pos, dim_pe), jnp.float32)
    pe = pe.at[:, 0::2].set(jnp.sin(pos))
    pe = pe.at[:, 1::2].set(jnp.cos(pos))
    return pe


def pos_emb_2d(pe_table, positions):
    """positions: (..., 2) int -> (..., model_dim) embeddings (concat row|col)."""
    rows = positions[..., 0]
    cols = positions[..., 1]
    return jnp.concatenate([pe_table[rows], pe_table[cols]], axis=-1)


# ---------------------------------------------------------------------------
# Params prep (one-time weight transpose) + full forward pass
# ---------------------------------------------------------------------------
def prepare_params(raw):
    """Transpose weights to (K, N) once; reshape biases to (1, N) once."""
    p = {"pe_table": raw["pe_table"]}
    for n in ("q", "k", "v", "o"):
        p[f"W{n}_t"] = raw[f"W{n}"].T
        p[f"b{n}"] = raw[f"b{n}"].reshape(1, -1)
    return p


@functools.partial(jax.jit, static_argnames=("num_heads",))
def cmha_forward(params, query, key, value, query_pos, key_pos, *, num_heads):
    B, L, E = query.shape
    S = key.shape[1]
    pe = params["pe_table"]

    # absolute 2D positional embedding, added BEFORE the Q/K projections (fused in-kernel)
    q_pe = pos_emb_2d(pe, query_pos).reshape(B * L, E).astype(query.dtype)
    k_pe = pos_emb_2d(pe, key_pos).reshape(B * S, E).astype(key.dtype)

    q = q_proj_pallas(query.reshape(B * L, E), q_pe, params["Wq_t"], params["bq"])
    k, v = kv_proj_pallas(key.reshape(B * S, E), k_pe, value.reshape(B * S, E),
                          params["Wk_t"], params["bk"],
                          params["Wv_t"], params["bv"])

    # heads stay packed along the embedding (lane) axis; W_o fused into the kernel
    out = attention_out_pallas(q.reshape(B, L, E), k.reshape(B, S, E),
                               v.reshape(B, S, E), params["Wo_t"], params["bo"],
                               num_heads=num_heads)                  # (B, L, E)
    return out


# ---------------------------------------------------------------------------
# Pure-JAX reference (for correctness check only)
# ---------------------------------------------------------------------------
def reference_forward(raw, query, key, value, query_pos, key_pos, num_heads):
    B, L, E = query.shape
    S = key.shape[1]
    Dh = E // num_heads
    pe = raw["pe_table"]
    q = (query + pos_emb_2d(pe, query_pos)) @ raw["Wq"].T + raw["bq"]
    k = (key + pos_emb_2d(pe, key_pos)) @ raw["Wk"].T + raw["bk"]
    v = value @ raw["Wv"].T + raw["bv"]
    qh = q.reshape(B, L, num_heads, Dh).transpose(0, 2, 1, 3)
    kh = k.reshape(B, S, num_heads, Dh).transpose(0, 2, 1, 3)
    vh = v.reshape(B, S, num_heads, Dh).transpose(0, 2, 1, 3)
    s = jnp.einsum("bhld,bhsd->bhls", qh, kh) / math.sqrt(Dh)
    p = jax.nn.softmax(s, axis=-1)
    o = jnp.einsum("bhls,bhsd->bhld", p, vh).transpose(0, 2, 1, 3).reshape(B, L, E)
    return o @ raw["Wo"].T + raw["bo"]


# ---------------------------------------------------------------------------
# Main
# ---------------------------------------------------------------------------
if __name__ == "__main__":
    B, L, S, E, H = 2, 8, 8, 32, 4
    MAX_POS = 1200

    key0 = jax.random.PRNGKey(0)
    keys = jax.random.split(key0, 12)

    bound = 1.0 / math.sqrt(E)
    raw_params = {
        "Wq": jax.random.uniform(keys[0], (E, E), jnp.float32, -bound, bound),
        "bq": jax.random.uniform(keys[1], (E,), jnp.float32, -bound, bound),
        "Wk": jax.random.uniform(keys[2], (E, E), jnp.float32, -bound, bound),
        "bk": jax.random.uniform(keys[3], (E,), jnp.float32, -bound, bound),
        "Wv": jax.random.uniform(keys[4], (E, E), jnp.float32, -bound, bound),
        "bv": jax.random.uniform(keys[5], (E,), jnp.float32, -bound, bound),
        "Wo": jax.random.uniform(keys[6], (E, E), jnp.float32, -bound, bound),
        "bo": jax.random.uniform(keys[7], (E,), jnp.float32, -bound, bound),
        "pe_table": make_pe_table(E, max_pos=MAX_POS),
    }
    params = prepare_params(raw_params)

    query = jax.random.normal(keys[8], (B, L, E), jnp.float32)
    key_ = jax.random.normal(keys[9], (B, S, E), jnp.float32)
    value = jax.random.normal(keys[10], (B, S, E), jnp.float32)
    q_pos = jax.random.randint(keys[11], (B, L, 2), 0, MAX_POS, jnp.int32)
    k_pos = jax.random.randint(jax.random.fold_in(key0, 99), (B, S, 2), 0, MAX_POS, jnp.int32)

    out = cmha_forward(params, query, key_, value, q_pos, k_pos, num_heads=H)
    out = jax.block_until_ready(out)

    ref = reference_forward(raw_params, query, key_, value, q_pos, k_pos, H)
    # tolerance loosened slightly for the approx (EUP) reciprocal in the softmax
    np.testing.assert_allclose(np.asarray(out), np.asarray(ref), rtol=2e-3, atol=2e-3)

    print("KERNEL_OK")
</pallas_src>

<mosaic_0001>
module attributes {stable_mosaic.version = 11 : i64} {
  func.func @_kv_proj_kernel(%arg0: i32, %arg1: memref<16x32xf32, #tpu.memory_space<vmem>>, %arg2: memref<16x32xf32, #tpu.memory_space<vmem>>, %arg3: memref<16x32xf32, #tpu.memory_space<vmem>>, %arg4: memref<32x32xf32, #tpu.memory_space<vmem>>, %arg5: memref<1x32xf32, #tpu.memory_space<vmem>>, %arg6: memref<32x32xf32, #tpu.memory_space<vmem>>, %arg7: memref<1x32xf32, #tpu.memory_space<vmem>>, %arg8: memref<16x32xf32, #tpu.memory_space<vmem>>, %arg9: memref<16x32xf32, #tpu.memory_space<vmem>>) attributes {dimension_semantics = [#tpu.dimension_semantics<parallel>], iteration_bounds = array<i64: 1>, scalar_prefetch = 0 : i64, scratch_operands = 0 : i64, tpu.core_type = #tpu.core_type<tc>, window_params = [{transform_indices = @transform_0, window_bounds = array<i64: 16, 32>}, {transform_indices = @transform_1, window_bounds = array<i64: 16, 32>}, {transform_indices = @transform_2, window_bounds = array<i64: 16, 32>}, {pipeline_mode = #tpu.pipeline_mode<synchronous>, transform_indices = @transform_3, window_bounds = array<i64: 32, 32>}, {pipeline_mode = #tpu.pipeline_mode<synchronous>, transform_indices = @transform_4, window_bounds = array<i64: 1, 32>}, {pipeline_mode = #tpu.pipeline_mode<synchronous>, transform_indices = @transform_5, window_bounds = array<i64: 32, 32>}, {pipeline_mode = #tpu.pipeline_mode<synchronous>, transform_indices = @transform_6, window_bounds = array<i64: 1, 32>}, {transform_indices = @transform_7, window_bounds = array<i64: 16, 32>}, {transform_indices = @transform_8, window_bounds = array<i64: 16, 32>}]} {
    %c0 = arith.constant 0 : index
    %c0_0 = arith.constant 0 : index
    %0 = vector.load %arg1[%c0, %c0_0] : memref<16x32xf32, #tpu.memory_space<vmem>>, vector<16x32xf32>
    %c0_1 = arith.constant 0 : index
    %c0_2 = arith.constant 0 : index
    %1 = vector.load %arg2[%c0_1, %c0_2] : memref<16x32xf32, #tpu.memory_space<vmem>>, vector<16x32xf32>
    %2 = arith.addf %0, %1 : vector<16x32xf32>
    %c0_3 = arith.constant 0 : index
    %c0_4 = arith.constant 0 : index
    %3 = vector.load %arg4[%c0_3, %c0_4] : memref<32x32xf32, #tpu.memory_space<vmem>>, vector<32x32xf32>
    %cst = arith.constant dense<0.000000e+00> : vector<16x32xf32>
    %4 = tpu.matmul %2, %3, %cst {dimension_numbers = #tpu.dot_dimension_numbers<[1], [0], [0], [1], [0, 0, 1, 1], [], []>} : vector<16x32xf32>, vector<32x32xf32>, vector<16x32xf32> -> vector<16x32xf32>
    %c0_5 = arith.constant 0 : index
    %c0_6 = arith.constant 0 : index
    %5 = vector.load %arg5[%c0_5, %c0_6] : memref<1x32xf32, #tpu.memory_space<vmem>>, vector<1x32xf32>
    %6 = vector.broadcast %5 : vector<1x32xf32> to vector<16x32xf32>
    %7 = arith.addf %4, %6 : vector<16x32xf32>
    %c0_7 = arith.constant 0 : index
    %c0_8 = arith.constant 0 : index
    %8 = vector.load %arg8[%c0_7, %c0_8] : memref<16x32xf32, #tpu.memory_space<vmem>>, vector<16x32xf32>
    tpu.vector_store %arg8[%c0_7, %c0_8], %7 {strides = array<i32>} : memref<16x32xf32, #tpu.memory_space<vmem>>, vector<16x32xf32>,
    %c0_9 = arith.constant 0 : index
    %c0_10 = arith.constant 0 : index
    %9 = vector.load %arg3[%c0_9, %c0_10] : memref<16x32xf32, #tpu.memory_space<vmem>>, vector<16x32xf32>
    %c0_11 = arith.constant 0 : index
    %c0_12 = arith.constant 0 : index
    %10 = vector.load %arg6[%c0_11, %c0_12] : memref<32x32xf32, #tpu.memory_space<vmem>>, vector<32x32xf32>
    %cst_13 = arith.constant dense<0.000000e+00> : vector<16x32xf32>
    %11 = tpu.matmul %9, %10, %cst_13 {dimension_numbers = #tpu.dot_dimension_numbers<[1], [0], [0], [1], [0, 0, 1, 1], [], []>} : vector<16x32xf32>, vector<32x32xf32>, vector<16x32xf32> -> vector<16x32xf32>
    %c0_14 = arith.constant 0 : index
    %c0_15 = arith.constant 0 : index
    %12 = vector.load %arg7[%c0_14, %c0_15] : memref<1x32xf32, #tpu.memory_space<vmem>>, vector<1x32xf32>
    %13 = vector.broadcast %12 : vector<1x32xf32> to vector<16x32xf32>
    %14 = arith.addf %11, %13 : vector<16x32xf32>
    %c0_16 = arith.constant 0 : index
    %c0_17 = arith.constant 0 : index
    %15 = vector.load %arg9[%c0_16, %c0_17] : memref<16x32xf32, #tpu.memory_space<vmem>>, vector<16x32xf32>
    tpu.vector_store %arg9[%c0_16, %c0_17], %14 {strides = array<i32>} : memref<16x32xf32, #tpu.memory_space<vmem>>, vector<16x32xf32>,
    return
  }
  func.func @transform_0(%arg0: i32) -> (i32, i32) {
    %c0_i32 = arith.constant 0 : i32
    %c0_i32_0 = arith.constant 0 : i32
    return %arg0, %c0_i32 : i32, i32
  }
  func.func @transform_1(%arg0: i32) -> (i32, i32) {
    %c0_i32 = arith.constant 0 : i32
    %c0_i32_0 = arith.constant 0 : i32
    return %arg0, %c0_i32 : i32, i32
  }
  func.func @transform_2(%arg0: i32) -> (i32, i32) {
    %c0_i32 = arith.constant 0 : i32
    %c0_i32_0 = arith.constant 0 : i32
    return %arg0, %c0_i32 : i32, i32
  }
  func.func @transform_3(%arg0: i32) -> (i32, i32) {
    %c0_i32 = arith.constant 0 : i32
    %c0_i32_0 = arith.constant 0 : i32
    %c0_i32_1 = arith.constant 0 : i32
    return %c0_i32, %c0_i32_0 : i32, i32
  }
  func.func @transform_4(%arg0: i32) -> (i32, i32) {
    %c0_i32 = arith.constant 0 : i32
    %c0_i32_0 = arith.constant 0 : i32
    %c0_i32_1 = arith.constant 0 : i32
    return %c0_i32, %c0_i32_0 : i32, i32
  }
  func.func @transform_5(%arg0: i32) -> (i32, i32) {
    %c0_i32 = arith.constant 0 : i32
    %c0_i32_0 = arith.constant 0 : i32
    %c0_i32_1 = arith.constant 0 : i32
    return %c0_i32, %c0_i32_0 : i32, i32
  }
  func.func @transform_6(%arg0: i32) -> (i32, i32) {
    %c0_i32 = arith.constant 0 : i32
    %c0_i32_0 = arith.constant 0 : i32
    %c0_i32_1 = arith.constant 0 : i32
    return %c0_i32, %c0_i32_0 : i32, i32
  }
  func.func @transform_7(%arg0: i32) -> (i32, i32) {
    %c0_i32 = arith.constant 0 : i32
    %c0_i32_0 = arith.constant 0 : i32
    return %arg0, %c0_i32 : i32, i32
  }
  func.func @transform_8(%arg0: i32) -> (i32, i32) {
    %c0_i32 = arith.constant 0 : i32
    %c0_i32_0 = arith.constant 0 : i32
    return %arg0, %c0_i32 : i32, i32
  }
}

module attributes {stable_mosaic.version = 11 : i64} {
  func.func @_attn_out_kernel(%arg0: i32, %arg1: i32, %arg2: memref<1x8x32xf32, #tpu.memory_space<vmem>>, %arg3: memref<1x8x32xf32, #tpu.memory_space<vmem>>, %arg4: memref<1x8x32xf32, #tpu.memory_space<vmem>>, %arg5: memref<32x32xf32, #tpu.memory_space<vmem>>, %arg6: memref<1x32xf32, #tpu.memory_space<vmem>>, %arg7: memref<1x8x32xf32, #tpu.memory_space<vmem>>) attributes {dimension_semantics = [#tpu.dimension_semantics<parallel>, #tpu.dimension_semantics<parallel>], iteration_bounds = array<i64: 2, 1>, scalar_prefetch = 0 : i64, scratch_operands = 0 : i64, tpu.core_type = #tpu.core_type<tc>, window_params = [{transform_indices = @transform_0, window_bounds = array<i64: 1, 8, 32>}, {transform_indices = @transform_1, window_bounds = array<i64: 1, 8, 32>}, {transform_indices = @transform_2, window_bounds = array<i64: 1, 8, 32>}, {pipeline_mode = #tpu.pipeline_mode<synchronous>, transform_indices = @transform_3, window_bounds = array<i64: 32, 32>}, {pipeline_mode = #tpu.pipeline_mode<synchronous>, transform_indices = @transform_4, window_bounds = array<i64: 1, 32>}, {transform_indices = @transform_5, window_bounds = array<i64: 1, 8, 32>}]} {
    %c0 = arith.constant 0 : index
    %c0_0 = arith.constant 0 : index
    %c0_1 = arith.constant 0 : index
    %0 = vector.load %arg2[%c0, %c0_0, %c0_1] : memref<1x8x32xf32, #tpu.memory_space<vmem>>, vector<1x8x32xf32>
    %1 = vector.shape_cast %0 : vector<1x8x32xf32> to vector<8x32xf32>
    %c0_2 = arith.constant 0 : index
    %c0_3 = arith.constant 0 : index
    %c0_4 = arith.constant 0 : index
    %2 = vector.load %arg3[%c0_2, %c0_3, %c0_4] : memref<1x8x32xf32, #tpu.memory_space<vmem>>, vector<1x8x32xf32>
    %3 = vector.shape_cast %2 : vector<1x8x32xf32> to vector<8x32xf32>
    %c0_5 = arith.constant 0 : index
    %c0_6 = arith.constant 0 : index
    %c0_7 = arith.constant 0 : index
    %4 = vector.load %arg4[%c0_5, %c0_6, %c0_7] : memref<1x8x32xf32, #tpu.memory_space<vmem>>, vector<1x8x32xf32>
    %5 = vector.shape_cast %4 : vector<1x8x32xf32> to vector<8x32xf32>
    %6 = vector.extract_strided_slice %1 {offsets = [0, 0], sizes = [8, 8], strides = [1, 1]} : vector<8x32xf32> to vector<8x8xf32>
    %7 = vector.extract_strided_slice %3 {offsets = [0, 0], sizes = [8, 8], strides = [1, 1]} : vector<8x32xf32> to vector<8x8xf32>
    %8 = vector.extract_strided_slice %5 {offsets = [0, 0], sizes = [8, 8], strides = [1, 1]} : vector<8x32xf32> to vector<8x8xf32>
    %cst = arith.constant dense<0.000000e+00> : vector<8x8xf32>
    %9 = tpu.matmul %6, %7, %cst {dimension_numbers = #tpu.dot_dimension_numbers<[1], [1], [0], [0], [0, 0, 1, 0], [], []>} : vector<8x8xf32>, vector<8x8xf32>, vector<8x8xf32> -> vector<8x8xf32>
    %cst_8 = arith.constant 0.353553385 : f32
    %10 = vector.broadcast %cst_8 : f32 to vector<8x8xf32>
    %11 = arith.mulf %9, %10 : vector<8x8xf32>
    %cst_9 = arith.constant dense<0xFF800000> : vector<8xf32>
    %12 = vector.multi_reduction <maximumf>, %11, %cst_9 [1] : vector<8x8xf32> to vector<8xf32>
    %13 = vector.shape_cast %12 : vector<8xf32> to vector<8x1xf32>
    %14 = vector.broadcast %13 : vector<8x1xf32> to vector<8x8xf32>
    %15 = arith.subf %11, %14 : vector<8x8xf32>
    %16 = math.exp %15 : vector<8x8xf32>
    %cst_10 = arith.constant dense<0.000000e+00> : vector<8xf32>
    %17 = vector.multi_reduction <add>, %16, %cst_10 [1] : vector<8x8xf32> to vector<8xf32>
    %18 = vector.shape_cast %17 : vector<8xf32> to vector<8x1xf32>
    %19 = tpu.reciprocal %18 {approx = true} : vector<8x1xf32> -> vector<8x1xf32>
    %20 = vector.broadcast %19 : vector<8x1xf32> to vector<8x8xf32>
    %21 = arith.mulf %16, %20 : vector<8x8xf32>
    %cst_11 = arith.constant dense<0.000000e+00> : vector<8x8xf32>
    %22 = tpu.matmul %21, %8, %cst_11 {dimension_numbers = #tpu.dot_dimension_numbers<[1], [0], [0], [1], [0, 0, 1, 1], [], []>} : vector<8x8xf32>, vector<8x8xf32>, vector<8x8xf32> -> vector<8x8xf32>
    %23 = vector.extract_strided_slice %1 {offsets = [0, 8], sizes = [8, 8], strides = [1, 1]} : vector<8x32xf32> to vector<8x8xf32>
    %24 = vector.extract_strided_slice %3 {offsets = [0, 8], sizes = [8, 8], strides = [1, 1]} : vector<8x32xf32> to vector<8x8xf32>
    %25 = vector.extract_strided_slice %5 {offsets = [0, 8], sizes = [8, 8], strides = [1, 1]} : vector<8x32xf32> to vector<8x8xf32>
    %cst_12 = arith.constant dense<0.000000e+00> : vector<8x8xf32>
    %26 = tpu.matmul %23, %24, %cst_12 {dimension_numbers = #tpu.dot_dimension_numbers<[1], [1], [0], [0], [0, 0, 1, 0], [], []>} : vector<8x8xf32>, vector<8x8xf32>, vector<8x8xf32> -> vector<8x8xf32>
    %cst_13 = arith.constant 0.353553385 : f32
    %27 = vector.broadcast %cst_13 : f32 to vector<8x8xf32>
    %28 = arith.mulf %26, %27 : vector<8x8xf32>
    %cst_14 = arith.constant dense<0xFF800000> : vector<8xf32>
    %29 = vector.multi_reduction <maximumf>, %28, %cst_14 [1] : vector<8x8xf32> to vector<8xf32>
    %30 = vector.shape_cast %29 : vector<8xf32> to vector<8x1xf32>
    %31 = vector.broadcast %30 : vector<8x1xf32> to vector<8x8xf32>
    %32 = arith.subf %28, %31 : vector<8x8xf32>
    %33 = math.exp %32 : vector<8x8xf32>
    %cst_15 = arith.constant dense<0.000000e+00> : vector<8xf32>
    %34 = vector.multi_reduction <add>, %33, %cst_15 [1] : vector<8x8xf32> to vector<8xf32>
    %35 = vector.shape_cast %34 : vector<8xf32> to vector<8x1xf32>
    %36 = tpu.reciprocal %35 {approx = true} : vector<8x1xf32> -> vector<8x1xf32>
    %37 = vector.broadcast %36 : vector<8x1xf32> to vector<8x8xf32>
    %38 = arith.mulf %33, %37 : vector<8x8xf32>
    %cst_16 = arith.constant dense<0.000000e+00> : vector<8x8xf32>
    %39 = tpu.matmul %38, %25, %cst_16 {dimension_numbers = #tpu.dot_dimension_numbers<[1], [0], [0], [1], [0, 0, 1, 1], [], []>} : vector<8x8xf32>, vector<8x8xf32>, vector<8x8xf32> -> vector<8x8xf32>
    %40 = vector.extract_strided_slice %1 {offsets = [0, 16], sizes = [8, 8], strides = [1, 1]} : vector<8x32xf32> to vector<8x8xf32>
    %41 = vector.extract_strided_slice %3 {offsets = [0, 16], sizes = [8, 8], strides = [1, 1]} : vector<8x32xf32> to vector<8x8xf32>
    %42 = vector.extract_strided_slice %5 {offsets = [0, 16], sizes = [8, 8], strides = [1, 1]} : vector<8x32xf32> to vector<8x8xf32>
    %cst_17 = arith.constant dense<0.000000e+00> : vector<8x8xf32>
    %43 = tpu.matmul %40, %41, %cst_17 {dimension_numbers = #tpu.dot_dimension_numbers<[1], [1], [0], [0], [0, 0, 1, 0], [], []>} : vector<8x8xf32>, vector<8x8xf32>, vector<8x8xf32> -> vector<8x8xf32>
    %cst_18 = arith.constant 0.353553385 : f32
    %44 = vector.broadcast %cst_18 : f32 to vector<8x8xf32>
    %45 = arith.mulf %43, %44 : vector<8x8xf32>
    %cst_19 = arith.constant dense<0xFF800000> : vector<8xf32>
    %46 = vector.multi_reduction <maximumf>, %45, %cst_19 [1] : vector<8x8xf32> to vector<8xf32>
    %47 = vector.shape_cast %46 : vector<8xf32> to vector<8x1xf32>
    %48 = vector.broadcast %47 : vector<8x1xf32> to vector<8x8xf32>
    %49 = arith.subf %45, %48 : vector<8x8xf32>
    %50 = math.exp %49 : vector<8x8xf32>
    %cst_20 = arith.constant dense<0.000000e+00> : vector<8xf32>
    %51 = vector.multi_reduction <add>, %50, %cst_20 [1] : vector<8x8xf32> to vector<8xf32>
    %52 = vector.shape_cast %51 : vector<8xf32> to vector<8x1xf32>
    %53 = tpu.reciprocal %52 {approx = true} : vector<8x1xf32> -> vector<8x1xf32>
    %54 = vector.broadcast %53 : vector<8x1xf32> to vector<8x8xf32>
    %55 = arith.mulf %50, %54 : vector<8x8xf32>
    %cst_21 = arith.constant dense<0.000000e+00> : vector<8x8xf32>
    %56 = tpu.matmul %55, %42, %cst_21 {dimension_numbers = #tpu.dot_dimension_numbers<[1], [0], [0], [1], [0, 0, 1, 1], [], []>} : vector<8x8xf32>, vector<8x8xf32>, vector<8x8xf32> -> vector<8x8xf32>
    %57 = vector.extract_strided_slice %1 {offsets = [0, 24], sizes = [8, 8], strides = [1, 1]} : vector<8x32xf32> to vector<8x8xf32>
    %58 = vector.extract_strided_slice %3 {offsets = [0, 24], sizes = [8, 8], strides = [1, 1]} : vector<8x32xf32> to vector<8x8xf32>
    %59 = vector.extract_strided_slice %5 {offsets = [0, 24], sizes = [8, 8], strides = [1, 1]} : vector<8x32xf32> to vector<8x8xf32>
    %cst_22 = arith.constant dense<0.000000e+00> : vector<8x8xf32>
    %60 = tpu.matmul %57, %58, %cst_22 {dimension_numbers = #tpu.dot_dimension_numbers<[1], [1], [0], [0], [0, 0, 1, 0], [], []>} : vector<8x8xf32>, vector<8x8xf32>, vector<8x8xf32> -> vector<8x8xf32>
    %cst_23 = arith.constant 0.353553385 : f32
    %61 = vector.broadcast %cst_23 : f32 to vector<8x8xf32>
    %62 = arith.mulf %60, %61 : vector<8x8xf32>
    %cst_24 = arith.constant dense<0xFF800000> : vector<8xf32>
    %63 = vector.multi_reduction <maximumf>, %62, %cst_24 [1] : vector<8x8xf32> to vector<8xf32>
    %64 = vector.shape_cast %63 : vector<8xf32> to vector<8x1xf32>
    %65 = vector.broadcast %64 : vector<8x1xf32> to vector<8x8xf32>
    %66 = arith.subf %62, %65 : vector<8x8xf32>
    %67 = math.exp %66 : vector<8x8xf32>
    %cst_25 = arith.constant dense<0.000000e+00> : vector<8xf32>
    %68 = vector.multi_reduction <add>, %67, %cst_25 [1] : vector<8x8xf32> to vector<8xf32>
    %69 = vector.shape_cast %68 : vector<8xf32> to vector<8x1xf32>
    %70 = tpu.reciprocal %69 {approx = true} : vector<8x1xf32> -> vector<8x1xf32>
    %71 = vector.broadcast %70 : vector<8x1xf32> to vector<8x8xf32>
    %72 = arith.mulf %67, %71 : vector<8x8xf32>
    %cst_26 = arith.constant dense<0.000000e+00> : vector<8x8xf32>
    %73 = tpu.matmul %72, %59, %cst_26 {dimension_numbers = #tpu.dot_dimension_numbers<[1], [0], [0], [1], [0, 0, 1, 1], [], []>} : vector<8x8xf32>, vector<8x8xf32>, vector<8x8xf32> -> vector<8x8xf32>
    %74 = tpu.concatenate %22, %39, %56, %73 in 1 : vector<8x8xf32>, vector<8x8xf32>, vector<8x8xf32>, vector<8x8xf32> -> vector<8x32xf32>
    %c0_27 = arith.constant 0 : index
    %c0_28 = arith.constant 0 : index
    %75 = vector.load %arg5[%c0_27, %c0_28] : memref<32x32xf32, #tpu.memory_space<vmem>>, vector<32x32xf32>
    %cst_29 = arith.constant dense<0.000000e+00> : vector<8x32xf32>
    %76 = tpu.matmul %74, %75, %cst_29 {dimension_numbers = #tpu.dot_dimension_numbers<[1], [0], [0], [1], [0, 0, 1, 1], [], []>} : vector<8x32xf32>, vector<32x32xf32>, vector<8x32xf32> -> vector<8x32xf32>
    %c0_30 = arith.constant 0 : index
    %c0_31 = arith.constant 0 : index
    %77 = vector.load %arg6[%c0_30, %c0_31] : memref<1x32xf32, #tpu.memory_space<vmem>>, vector<1x32xf32>
    %78 = vector.broadcast %77 : vector<1x32xf32> to vector<8x32xf32>
    %79 = arith.addf %76, %78 : vector<8x32xf32>
    %c0_32 = arith.constant 0 : index
    %c0_33 = arith.constant 0 : index
    %c0_34 = arith.constant 0 : index
    %80 = vector.load %arg7[%c0_32, %c0_33, %c0_34] : memref<1x8x32xf32, #tpu.memory_space<vmem>>, vector<1x8x32xf32>
    %81 = vector.shape_cast %80 : vector<1x8x32xf32> to vector<8x32xf32>
    %82 = vector.shape_cast %79 : vector<8x32xf32> to vector<1x8x32xf32>
    tpu.vector_store %arg7[%c0_32, %c0_33, %c0_34], %82 {strides = array<i32>} : memref<1x8x32xf32, #tpu.memory_space<vmem>>, vector<1x8x32xf32>,
    return
  }
  func.func @transform_0(%arg0: i32, %arg1: i32) -> (i32, i32, i32) {
    %c0_i32 = arith.constant 0 : i32
    %c0_i32_0 = arith.constant 0 : i32
    return %arg0, %arg1, %c0_i32 : i32, i32, i32
  }
  func.func @transform_1(%arg0: i32, %arg1: i32) -> (i32, i32, i32) {
    %c0_i32 = arith.constant 0 : i32
    %c0_i32_0 = arith.constant 0 : i32
    %c0_i32_1 = arith.constant 0 : i32
    return %arg0, %c0_i32, %c0_i32_0 : i32, i32, i32
  }
  func.func @transform_2(%arg0: i32, %arg1: i32) -> (i32, i32, i32) {
    %c0_i32 = arith.constant 0 : i32
    %c0_i32_0 = arith.constant 0 : i32
    %c0_i32_1 = arith.constant 0 : i32
    return %arg0, %c0_i32, %c0_i32_0 : i32, i32, i32
  }
  func.func @transform_3(%arg0: i32, %arg1: i32) -> (i32, i32) {
    %c0_i32 = arith.constant 0 : i32
    %c0_i32_0 = arith.constant 0 : i32
    %c0_i32_1 = arith.constant 0 : i32
    return %c0_i32, %c0_i32_0 : i32, i32
  }
  func.func @transform_4(%arg0: i32, %arg1: i32) -> (i32, i32) {
    %c0_i32 = arith.constant 0 : i32
    %c0_i32_0 = arith.constant 0 : i32
    %c0_i32_1 = arith.constant 0 : i32
    return %c0_i32, %c0_i32_0 : i32, i32
  }
  func.func @transform_5(%arg0: i32, %arg1: i32) -> (i32, i32, i32) {
    %c0_i32 = arith.constant 0 : i32
    %c0_i32_0 = arith.constant 0 : i32
    return %arg0, %arg1, %c0_i32 : i32, i32, i32
  }
}

module attributes {stable_mosaic.version = 11 : i64} {
  func.func @_linear_posadd_kernel(%arg0: i32, %arg1: memref<16x32xf32, #tpu.memory_space<vmem>>, %arg2: memref<16x32xf32, #tpu.memory_space<vmem>>, %arg3: memref<32x32xf32, #tpu.memory_space<vmem>>, %arg4: memref<1x32xf32, #tpu.memory_space<vmem>>, %arg5: memref<16x32xf32, #tpu.memory_space<vmem>>) attributes {dimension_semantics = [#tpu.dimension_semantics<parallel>], iteration_bounds = array<i64: 1>, scalar_prefetch = 0 : i64, scratch_operands = 0 : i64, tpu.core_type = #tpu.core_type<tc>, window_params = [{transform_indices = @transform_0, window_bounds = array<i64: 16, 32>}, {transform_indices = @transform_1, window_bounds = array<i64: 16, 32>}, {pipeline_mode = #tpu.pipeline_mode<synchronous>, transform_indices = @transform_2, window_bounds = array<i64: 32, 32>}, {pipeline_mode = #tpu.pipeline_mode<synchronous>, transform_indices = @transform_3, window_bounds = array<i64: 1, 32>}, {transform_indices = @transform_4, window_bounds = array<i64: 16, 32>}]} {
    %c0 = arith.constant 0 : index
    %c0_0 = arith.constant 0 : index
    %0 = vector.load %arg1[%c0, %c0_0] : memref<16x32xf32, #tpu.memory_space<vmem>>, vector<16x32xf32>
    %c0_1 = arith.constant 0 : index
    %c0_2 = arith.constant 0 : index
    %1 = vector.load %arg2[%c0_1, %c0_2] : memref<16x32xf32, #tpu.memory_space<vmem>>, vector<16x32xf32>
    %2 = arith.addf %0, %1 : vector<16x32xf32>
    %c0_3 = arith.constant 0 : index
    %c0_4 = arith.constant 0 : index
    %3 = vector.load %arg3[%c0_3, %c0_4] : memref<32x32xf32, #tpu.memory_space<vmem>>, vector<32x32xf32>
    %cst = arith.constant dense<0.000000e+00> : vector<16x32xf32>
    %4 = tpu.matmul %2, %3, %cst {dimension_numbers = #tpu.dot_dimension_numbers<[1], [0], [0], [1], [0, 0, 1, 1], [], []>} : vector<16x32xf32>, vector<32x32xf32>, vector<16x32xf32> -> vector<16x32xf32>
    %c0_5 = arith.constant 0 : index
    %c0_6 = arith.constant 0 : index
    %5 = vector.load %arg4[%c0_5, %c0_6] : memref<1x32xf32, #tpu.memory_space<vmem>>, vector<1x32xf32>
    %6 = vector.broadcast %5 : vector<1x32xf32> to vector<16x32xf32>
    %7 = arith.addf %4, %6 : vector<16x32xf32>
    %c0_7 = arith.constant 0 : index
    %c0_8 = arith.constant 0 : index
    %8 = vector.load %arg5[%c0_7, %c0_8] : memref<16x32xf32, #tpu.memory_space<vmem>>, vector<16x32xf32>
    tpu.vector_store %arg5[%c0_7, %c0_8], %7 {strides = array<i32>} : memref<16x32xf32, #tpu.memory_space<vmem>>, vector<16x32xf32>,
    return
  }
  func.func @transform_0(%arg0: i32) -> (i32, i32) {
    %c0_i32 = arith.constant 0 : i32
    %c0_i32_0 = arith.constant 0 : i32
    return %arg0, %c0_i32 : i32, i32
  }
  func.func @transform_1(%arg0: i32) -> (i32, i32) {
    %c0_i32 = arith.constant 0 : i32
    %c0_i32_0 = arith.constant 0 : i32
    return %arg0, %c0_i32 : i32, i32
  }
  func.func @transform_2(%arg0: i32) -> (i32, i32) {
    %c0_i32 = arith.constant 0 : i32
    %c0_i32_0 = arith.constant 0 : i32
    %c0_i32_1 = arith.constant 0 : i32
    return %c0_i32, %c0_i32_0 : i32, i32
  }
  func.func @transform_3(%arg0: i32) -> (i32, i32) {
    %c0_i32 = arith.constant 0 : i32
    %c0_i32_0 = arith.constant 0 : i32
    %c0_i32_1 = arith.constant 0 : i32
    return %c0_i32, %c0_i32_0 : i32, i32
  }
  func.func @transform_4(%arg0: i32) -> (i32, i32) {
    %c0_i32 = arith.constant 0 : i32
    %c0_i32_0 = arith.constant 0 : i32
    return %arg0, %c0_i32 : i32, i32
  }
}

</mosaic_0001>

<llo_original>
// kernel: cmha_forward.3
$region0: #{cmha_forward.3}
  #allocation0 [shape = 'u32[]', space=smem, size = 0x4, offset = 0x4, fixed_abs, tag = 'smem constant byte address 0x4 - core index']
  #allocation1 [shape = 'u32[72,128]{1,0:T(1,128)}', space=vmem, size = 0x9000, scoped, tag = 'internal scratch']
  %s0 = inlined_call_operand.vmem [shape: f32[16,32], index: 0, kind: input, shape index: {}]
  %s1 = inlined_call_operand.vmem [shape: f32[16,32], index: 1, kind: input, shape index: {}]
  %s2 = inlined_call_operand.vmem [shape: f32[32,32], index: 2, kind: input, shape index: {}]
  %s3 = inlined_call_operand.vmem [shape: f32[1,32], index: 3, kind: input, shape index: {}]
  %s4 = inlined_call_operand.vmem [shape: f32[16,32], index: 4, kind: output, shape index: {}]
  %s5 = sld [smem:[#allocation0]]
  $region26: #{cmha_forward.3} parent=0
    _
  %s7 = ssub.s32 1, %s5
  %s8 = scalar_select 0, %s7, %s5
  // Predicated region
  $region2: #{cmha_forward.3} parent=0 // pred_check
    _
  $region3: #{cmha_forward.3} parent=0 // pred_check_branch
    %10 = sbr.rel (0) target = $region5
  $region4: #{cmha_forward.3} parent=0 // pred_region
    _
  $region5: #{cmha_forward.3} parent=0 // pred_fallthru
    _
  // Predicated region
  $region6: #{cmha_forward.3} parent=0 // pred_check
    _
  $region7: #{cmha_forward.3} parent=0 // pred_check_branch
    %12 = sbr.rel (0) target = $region9
  $region8: #{cmha_forward.3} parent=0 // pred_region
    _
  $region9: #{cmha_forward.3} parent=0 // pred_fallthru
    _
  // Predicated region
  $region10: #{cmha_forward.3} parent=0 // pred_check
    _
  $region11: #{cmha_forward.3} parent=0 // pred_check_branch
    %14 = sbr.rel (0) target = $region13
  $region12: #{cmha_forward.3} parent=0 // pred_region
    _
  $region13: #{cmha_forward.3} parent=0 // pred_fallthru
    _
  // Predicated region
  $region14: #{cmha_forward.3} parent=0 // pred_check
    _
  $region15: #{cmha_forward.3} parent=0 // pred_check_branch
    %16 = sbr.rel (0) target = $region17
  $region16: #{cmha_forward.3} parent=0 // pred_region
    _
  $region17: #{cmha_forward.3} parent=0 // pred_fallthru
    _
  %v17 = vld [vmem:[%s0] sm:$0xff]
  %v18 = vld [vmem:[%s0 + $0x8] sm:$0xff]
  %v19 = vld [vmem:[%s1] sm:$0xff]
  %v20 = vld [vmem:[%s1 + $0x8] sm:$0xff]
  %v21 = vadd.f32 %v17, %v19
  %v22 = vadd.f32 %v18, %v20
  %v23 = vld [vmem:[%s2] sm:$0xff]
  %v24 = vld [vmem:[%s2 + $0x8] sm:$0xff]
  %v25 = vld [vmem:[%s2 + $0x10] sm:$0xff]
  %v26 = vld [vmem:[%s2 + $0x18] sm:$0xff]
  %v27 = vld [vmem:[%s3] sm:$0x1]
  %v29 = vperm.slane %v27, 0
  %vm31 = vcmask 261120
  %v33 = vsel %vm31, %v21, 0
  %v36 = vsel %vm31, %v22, 0
  %38 = vmatpush.msra.mxu0 0.0
  %39 = vmatpush.msra.mxu0 0.0
  %40 = vmatpush.msra.mxu0 0.0
  %41 = vmatpush.msra.mxu0 0.0
  %42 = vmatpush.msra.mxu0 0.0
  %43 = vmatpush.msra.mxu0 0.0
  %44 = vmatpush.msra.mxu0 0.0
  %45 = vmatpush.msra.mxu0 0.0
  %46 = vmatpush.msra.mxu0 0.0
  %47 = vmatpush.msra.mxu0 0.0
  %48 = vmatpush.msra.mxu0 0.0
  %49 = vmatpush.msra.mxu0 0.0
  %50 = vmatpush.msra.mxu0 %v26
  %51 = vmatpush.msra.mxu0 %v25
  %52 = vmatpush.msra.mxu0 %v24
  %53 = vmatpush.msra.mxu0 %v23
  %54 = vmatmul.f32.gmra.mxu0 %v33
  %v55 = vpop.f32.mrf.mxu0
  %v56 = vadd.f32 %v29, %v55
  %57 = vmatmul.f32.gmra.mxu0 %v36
  %v58 = vpop.f32.mrf.mxu0
  %v59 = vadd.f32 %v29, %v58
  %60 = vdwg.mxu0
  %61 = vst.msk [vmem:[%s4] sm:$0xff] %vm31, %v56
  %62 = vst.msk [vmem:[%s4 + $0x8] sm:$0xff] %vm31, %v59
  // Predicated region
  $region18: #{cmha_forward.3} parent=0 // pred_check
    _
  $region19: #{cmha_forward.3} parent=0 // pred_check_branch
    %64 = sbr.rel (0) target = $region21
  $region20: #{cmha_forward.3} parent=0 // pred_region
    _
  $region21: #{cmha_forward.3} parent=0 // pred_fallthru
    _
  // Predicated region
  $region22: #{cmha_forward.3} parent=0 // pred_check
    _
  $region23: #{cmha_forward.3} parent=0 // pred_check_branch
    %66 = sbr.rel (0) target = $region25
  $region24: #{cmha_forward.3} parent=0 // pred_region
    _
  $region25: #{cmha_forward.3} parent=0 // pred_fallthru
    _

// kernel: cmha_forward.4
$region0: #{cmha_forward.4}
  #allocation0 [shape = 'u32[]', space=smem, size = 0x4, offset = 0x4, fixed_abs, tag = 'smem constant byte address 0x4 - core index']
  #allocation1 [shape = 'u32[72,128]{1,0:T(1,128)}', space=vmem, size = 0x9000, scoped, tag = 'internal scratch']
  %s0 = inlined_call_operand.vmem [shape: f32[16,32], index: 0, kind: input, shape index: {}]
  %s1 = inlined_call_operand.vmem [shape: f32[16,32], index: 1, kind: input, shape index: {}]
  %s2 = inlined_call_operand.vmem [shape: f32[16,32], index: 2, kind: input, shape index: {}]
  %s3 = inlined_call_operand.vmem [shape: f32[32,32], index: 3, kind: input, shape index: {}]
  %s4 = inlined_call_operand.vmem [shape: f32[1,32], index: 4, kind: input, shape index: {}]
  %s5 = inlined_call_operand.vmem [shape: f32[32,32], index: 5, kind: input, shape index: {}]
  %s6 = inlined_call_operand.vmem [shape: f32[1,32], index: 6, kind: input, shape index: {}]
  %s7 = inlined_call_operand.vmem [shape: f32[16,32], index: 7, kind: output, shape index: {0}]
  %s8 = inlined_call_operand.vmem [shape: f32[16,32], index: 8, kind: output, shape index: {1}]
  %9 = xla_tuple %s7, %s8
  %s10 = sld [smem:[#allocation0]]
  $region46: #{cmha_forward.4} parent=0
    _
  %s12 = ssub.s32 1, %s10
  %s13 = scalar_select 0, %s12, %s10
  // Predicated region
  $region2: #{cmha_forward.4} parent=0 // pred_check
    _
  $region3: #{cmha_forward.4} parent=0 // pred_check_branch
    %15 = sbr.rel (0) target = $region5
  $region4: #{cmha_forward.4} parent=0 // pred_region
    _
  $region5: #{cmha_forward.4} parent=0 // pred_fallthru
    _
  // Predicated region
  $region6: #{cmha_forward.4} parent=0 // pred_check
    _
  $region7: #{cmha_forward.4} parent=0 // pred_check_branch
    %17 = sbr.rel (0) target = $region9
  $region8: #{cmha_forward.4} parent=0 // pred_region
    _
  $region9: #{cmha_forward.4} parent=0 // pred_fallthru
    _
  // Predicated region
  $region10: #{cmha_forward.4} parent=0 // pred_check
    _
  $region11: #{cmha_forward.4} parent=0 // pred_check_branch
    %19 = sbr.rel (0) target = $region13
  $region12: #{cmha_forward.4} parent=0 // pred_region
    _
  $region13: #{cmha_forward.4} parent=0 // pred_fallthru
    _
  // Predicated region
  $region14: #{cmha_forward.4} parent=0 // pred_check
    _
  $region15: #{cmha_forward.4} parent=0 // pred_check_branch
    %21 = sbr.rel (0) target = $region17
  $region16: #{cmha_forward.4} parent=0 // pred_region
    _
  $region17: #{cmha_forward.4} parent=0 // pred_fallthru
    _
  // Predicated region
  $region18: #{cmha_forward.4} parent=0 // pred_check
    _
  $region19: #{cmha_forward.4} parent=0 // pred_check_branch
    %23 = sbr.rel (0) target = $region21
  $region20: #{cmha_forward.4} parent=0 // pred_region
    _
  $region21: #{cmha_forward.4} parent=0 // pred_fallthru
    _
  // Predicated region
  $region22: #{cmha_forward.4} parent=0 // pred_check
    _
  $region23: #{cmha_forward.4} parent=0 // pred_check_branch
    %25 = sbr.rel (0) target = $region25
  $region24: #{cmha_forward.4} parent=0 // pred_region
    _
  $region25: #{cmha_forward.4} parent=0 // pred_fallthru
    _
  // Predicated region
  $region26: #{cmha_forward.4} parent=0 // pred_check
    _
  $region27: #{cmha_forward.4} parent=0 // pred_check_branch
    %27 = sbr.rel (0) target = $region29
  $region28: #{cmha_forward.4} parent=0 // pred_region
    _
  $region29: #{cmha_forward.4} parent=0 // pred_fallthru
    _
  %v28 = vld [vmem:[%s0] sm:$0xff]
  %v29 = vld [vmem:[%s0 + $0x8] sm:$0xff]
  %v30 = vld [vmem:[%s1] sm:$0xff]
  %v31 = vld [vmem:[%s1 + $0x8] sm:$0xff]
  %v32 = vadd.f32 %v28, %v30
  %v33 = vadd.f32 %v29, %v31
  %v34 = vld [vmem:[%s3] sm:$0xff]
  %v35 = vld [vmem:[%s3 + $0x8] sm:$0xff]
  %v36 = vld [vmem:[%s3 + $0x10] sm:$0xff]
  %v37 = vld [vmem:[%s3 + $0x18] sm:$0xff]
  %v38 = vld [vmem:[%s4] sm:$0x1]
  %v40 = vperm.slane %v38, 0
  %vm42 = vcmask 261120
  %v44 = vsel %vm42, %v32, 0
  %v47 = vsel %vm42, %v33, 0
  %49 = vmatpush.msra.mxu0 0.0
  %50 = vmatpush.msra.mxu0 0.0
  %51 = vmatpush.msra.mxu0 0.0
  %52 = vmatpush.msra.mxu0 0.0
  %53 = vmatpush.msra.mxu0 0.0
  %54 = vmatpush.msra.mxu0 0.0
  %55 = vmatpush.msra.mxu0 0.0
  %56 = vmatpush.msra.mxu0 0.0
  %57 = vmatpush.msra.mxu0 0.0
  %58 = vmatpush.msra.mxu0 0.0
  %59 = vmatpush.msra.mxu0 0.0
  %60 = vmatpush.msra.mxu0 0.0
  %61 = vmatpush.msra.mxu0 %v37
  %62 = vmatpush.msra.mxu0 %v36
  %63 = vmatpush.msra.mxu0 %v35
  %64 = vmatpush.msra.mxu0 %v34
  %65 = vmatmul.f32.gmra.mxu0 %v44
  %v66 = vpop.f32.mrf.mxu0
  %v67 = vadd.f32 %v40, %v66
  %68 = vmatmul.f32.gmra.mxu0 %v47
  %v69 = vpop.f32.mrf.mxu0
  %v70 = vadd.f32 %v40, %v69
  %71 = vdwg.mxu0
  %72 = vst.msk [vmem:[%s7] sm:$0xff] %vm42, %v67
  %73 = vst.msk [vmem:[%s7 + $0x8] sm:$0xff] %vm42, %v70
  %v74 = vld [vmem:[%s2] sm:$0xff]
  %v75 = vld [vmem:[%s2 + $0x8] sm:$0xff]
  %v76 = vld [vmem:[%s5] sm:$0xff]
  %v77 = vld [vmem:[%s5 + $0x8] sm:$0xff]
  %v78 = vld [vmem:[%s5 + $0x10] sm:$0xff]
  %v79 = vld [vmem:[%s5 + $0x18] sm:$0xff]
  %v80 = vld [vmem:[%s6] sm:$0x1]
  %v82 = vperm.slane %v80, 0
  %v85 = vsel %vm42, %v74, 0
  %v88 = vsel %vm42, %v75, 0
  %90 = vmatpush.msra.mxu0 0.0
  %91 = vmatpush.msra.mxu0 0.0
  %92 = vmatpush.msra.mxu0 0.0
  %93 = vmatpush.msra.mxu0 0.0
  %94 = vmatpush.msra.mxu0 0.0
  %95 = vmatpush.msra.mxu0 0.0
  %96 = vmatpush.msra.mxu0 0.0
  %97 = vmatpush.msra.mxu0 0.0
  %98 = vmatpush.msra.mxu0 0.0
  %99 = vmatpush.msra.mxu0 0.0
  %100 = vmatpush.msra.mxu0 0.0
  %101 = vmatpush.msra.mxu0 0.0
  %102 = vmatpush.msra.mxu0 %v79
  %103 = vmatpush.msra.mxu0 %v78
  %104 = vmatpush.msra.mxu0 %v77
  %105 = vmatpush.msra.mxu0 %v76
  %106 = vmatmul.f32.gmra.mxu0 %v85
  %v107 = vpop.f32.mrf.mxu0
  %v108 = vadd.f32 %v82, %v107
  %109 = vmatmul.f32.gmra.mxu0 %v88
  %v110 = vpop.f32.mrf.mxu0
  %v111 = vadd.f32 %v82, %v110
  %112 = vdwg.mxu0
  %113 = vst.msk [vmem:[%s8] sm:$0xff] %vm42, %v108
  %114 = vst.msk [vmem:[%s8 + $0x8] sm:$0xff] %vm42, %v111
  // Predicated region
  $region30: #{cmha_forward.4} parent=0 // pred_check
    _
  $region31: #{cmha_forward.4} parent=0 // pred_check_branch
    %116 = sbr.rel (0) target = $region33
  $region32: #{cmha_forward.4} parent=0 // pred_region
    _
  $region33: #{cmha_forward.4} parent=0 // pred_fallthru
    _
  // Predicated region
  $region34: #{cmha_forward.4} parent=0 // pred_check
    _
  $region35: #{cmha_forward.4} parent=0 // pred_check_branch
    %118 = sbr.rel (0) target = $region37
  $region36: #{cmha_forward.4} parent=0 // pred_region
    _
  $region37: #{cmha_forward.4} parent=0 // pred_fallthru
    _
  // Predicated region
  $region38: #{cmha_forward.4} parent=0 // pred_check
    _
  $region39: #{cmha_forward.4} parent=0 // pred_check_branch
    %120 = sbr.rel (0) target = $region41
  $region40: #{cmha_forward.4} parent=0 // pred_region
    _
  $region41: #{cmha_forward.4} parent=0 // pred_fallthru
    _
  // Predicated region
  $region42: #{cmha_forward.4} parent=0 // pred_check
    _
  $region43: #{cmha_forward.4} parent=0 // pred_check_branch
    %122 = sbr.rel (0) target = $region45
  $region44: #{cmha_forward.4} parent=0 // pred_region
    _
  $region45: #{cmha_forward.4} parent=0 // pred_fallthru
    _

// kernel: cmha_forward.5
$region0: #{cmha_forward.5}
  #allocation0 [shape = 'u32[]', space=smem, size = 0x4, offset = 0x4, fixed_abs, tag = 'smem constant byte address 0x4 - core index']
  #allocation1 [shape = 'u32[72,128]{1,0:T(1,128)}', space=vmem, size = 0x9000, scoped, tag = 'internal scratch']
  %s0 = inlined_call_operand.vmem [shape: f32[2,8,32], index: 0, kind: input, shape index: {}]
  %s1 = inlined_call_operand.vmem [shape: f32[2,8,32], index: 1, kind: input, shape index: {}]
  %s2 = inlined_call_operand.vmem [shape: f32[2,8,32], index: 2, kind: input, shape index: {}]
  %s3 = inlined_call_operand.vmem [shape: f32[32,32], index: 3, kind: input, shape index: {}]
  %s4 = inlined_call_operand.vmem [shape: f32[1,32], index: 4, kind: input, shape index: {}]
  %s5 = inlined_call_operand.hbm [shape: f32[2,8,32], index: 5, kind: output, shape index: {}]
  %s6 = sld [smem:[#allocation0]]
  $region53: #{cmha_forward.5} parent=0
    _
  %s8 = ssub.s32 1, %s6
  %s9 = scalar_select 0, %s8, %s6
  $region1: #{cmha_forward.5} parent=0
    #allocation2 [shape = 'u8[8192]{0}', space=vmem, size = 0x2000, scoped, tag = 'output window, operand 0']
    #allocation3 [shape = 's32[2]{0}', space=sflag, size = 0x8, scoped, tag = 'scoped memory for cmha_forward.5']
    %10 = vsyncpa [#allocation3], 0
    %s11 = scalar_lea.sflag [#allocation3], 1
    %12 = vsyncpa %s11, 0
    loop: start=0, step=1, limit=4
    $region2: #{cmha_forward.5} parent=1 // loop_pre_header
      _
    $region3: #{cmha_forward.5} parent=1 // loop_header
      %s14 = sphi 0, %s18
      %p15 = scmp.ge.s32.totalorder %s14, 4
      %s21 = sphi 0, %s33
      %s22 = sphi 0, %s29
      %s23 = sphi 0, %s21
      %s24 = sphi 0, %s22
      %s25 = sphi 0, %s23
      %s26 = sphi 0, %s24
      %s38 = sphi 0, %s40
      %s41 = sphi 0, %s38
      %s42 = sphi 0, %s41
      %s58 = sphi 0, %s42
      %s64 = sphi 0, %s66
      %s67 = sphi 0, %s64
      %s68 = sphi 0, %s67
      %s84 = sphi 0, %s68
      %s90 = sphi 0, %s92
      %s93 = sphi 0, %s90
      %s94 = sphi 0, %s93
      %s110 = sphi 0, %s94
      %s114 = sphi 0, %s114
      %s116 = sphi 0, %s114
      %s117 = sphi 0, %s116
      %s131 = sphi 0, %s117
      %s135 = sphi 0, %s135
      %s137 = sphi 0, %s135
      %s138 = sphi 0, %s137
      %s152 = sphi 0, %s138
      %s160 = sphi 0, %s162
      %s163 = sphi 0, %s160
      %s164 = sphi 0, %s163
      %s180 = sphi 0, %s164
    $region4: #{cmha_forward.5} parent=1 // loop_header_branch
      %17 = sbr.rel (%p15) target = $region8
    $region5: #{cmha_forward.5} parent=1 // loop_body
      %s19 = ssub.s32 %s14, 1
      %s20 = ssub.s32 %s14, 2
      %s27 = sadd.s32 1, %s22
      %p28 = scmp.ge.s32.totalorder %s27, 1
      %s29 = scalar_select %p28, 0, %s27
      %s30 = sadd.s32 1, %s21
      %s31 = scalar_select %p28, %s30, %s21
      %p32 = scmp.ge.s32.totalorder %s31, 2
      %s33 = scalar_select %p32, 0, %s31
      %s34 = ssub.s32 %s21, %s33
      %s35 = ssub.s32 %s22, %s29
      %s36 = sor.u32 %s34, %s35
      %p37 = scmp.eq.s32.totalorder %s36, 0
      %s39 = sadd.s32 %s38, 1
      %s40 = scalar_select %p37, %s38, %s39
      %p43 = pneg %p37
      %p44 = scmp.eq.s32.totalorder %s14, 1
      %p45 = por %p43, %p44
      %p46 = scmp.ne.s32.totalorder %s38, %s41
      %p47 = scmp.eq.s32.totalorder %s14, 0
      %p48 = por %p46, %p47
      %p49 = scmp.ne.s32.totalorder %s38, %s41
      %p50 = scmp.eq.s32.totalorder %s19, 1
      %p51 = por %p49, %p50
      %p52 = scmp.ne.s32.totalorder %s41, %s42
      %p53 = scmp.eq.s32.totalorder %s19, 0
      %p54 = por %p52, %p53
      %p55 = scmp.ne.s32.totalorder %s41, %s42
      %p56 = scmp.eq.s32.totalorder %s20, 1
      %p57 = por %p55, %p56
      %p59 = scmp.ne.s32.totalorder %s42, %s58
      %p60 = scmp.eq.s32.totalorder %s20, 0
      %p61 = por %p59, %p60
      %s62 = ssub.s32 %s21, %s33
      %p63 = scmp.eq.s32.totalorder %s62, 0
      %s65 = sadd.s32 %s64, 1
      %s66 = scalar_select %p63, %s64, %s65
      %p69 = pneg %p63
      %p70 = scmp.eq.s32.totalorder %s14, 1
      %p71 = por %p69, %p70
      %p72 = scmp.ne.s32.totalorder %s64, %s67
      %p73 = scmp.eq.s32.totalorder %s14, 0
      %p74 = por %p72, %p73
      %p75 = scmp.ne.s32.totalorder %s64, %s67
      %p76 = scmp.eq.s32.totalorder %s19, 1
      %p77 = por %p75, %p76
      %p78 = scmp.ne.s32.totalorder %s67, %s68
      %p79 = scmp.eq.s32.totalorder %s19, 0
      %p80 = por %p78, %p79
      %p81 = scmp.ne.s32.totalorder %s67, %s68
      %p82 = scmp.eq.s32.totalorder %s20, 1
      %p83 = por %p81, %p82
      %p85 = scmp.ne.s32.totalorder %s68, %s84
      %p86 = scmp.eq.s32.totalorder %s20, 0
      %p87 = por %p85, %p86
      %s88 = ssub.s32 %s21, %s33
      %p89 = scmp.eq.s32.totalorder %s88, 0
      %s91 = sadd.s32 %s90, 1
      %s92 = scalar_select %p89, %s90, %s91
      %p95 = pneg %p89
      %p96 = scmp.eq.s32.totalorder %s14, 1
      %p97 = por %p95, %p96
      %p98 = scmp.ne.s32.totalorder %s90, %s93
      %p99 = scmp.eq.s32.totalorder %s14, 0
      %p100 = por %p98, %p99
      %p101 = scmp.ne.s32.totalorder %s90, %s93
      %p102 = scmp.eq.s32.totalorder %s19, 1
      %p103 = por %p101, %p102
      %p104 = scmp.ne.s32.totalorder %s93, %s94
      %p105 = scmp.eq.s32.totalorder %s19, 0
      %p106 = por %p104, %p105
      %p107 = scmp.ne.s32.totalorder %s93, %s94
      %p108 = scmp.eq.s32.totalorder %s20, 1
      %p109 = por %p107, %p108
      %p111 = scmp.ne.s32.totalorder %s94, %s110
      %p112 = scmp.eq.s32.totalorder %s20, 0
      %p113 = por %p111, %p112
      %s115 = sadd.s32 %s114, 1
      %p118 = scmp.eq.s32.totalorder %s14, 1
      %p119 = scmp.ne.s32.totalorder %s114, %s116
      %p120 = scmp.eq.s32.totalorder %s14, 0
      %p121 = por %p119, %p120
      %p122 = scmp.ne.s32.totalorder %s114, %s116
      %p123 = scmp.eq.s32.totalorder %s19, 1
      %p124 = por %p122, %p123
      %p125 = scmp.ne.s32.totalorder %s116, %s117
      %p126 = scmp.eq.s32.totalorder %s19, 0
      %p127 = por %p125, %p126
      %p128 = scmp.ne.s32.totalorder %s116, %s117
      %p129 = scmp.eq.s32.totalorder %s20, 1
      %p130 = por %p128, %p129
      %p132 = scmp.ne.s32.totalorder %s117, %s131
      %p133 = scmp.eq.s32.totalorder %s20, 0
      %p134 = por %p132, %p133
      %s136 = sadd.s32 %s135, 1
      %p139 = scmp.eq.s32.totalorder %s14, 1
      %p140 = scmp.ne.s32.totalorder %s135, %s137
      %p141 = scmp.eq.s32.totalorder %s14, 0
      %p142 = por %p140, %p141
      %p143 = scmp.ne.s32.totalorder %s135, %s137
      %p144 = scmp.eq.s32.totalorder %s19, 1
      %p145 = por %p143, %p144
      %p146 = scmp.ne.s32.totalorder %s137, %s138
      %p147 = scmp.eq.s32.totalorder %s19, 0
      %p148 = por %p146, %p147
      %p149 = scmp.ne.s32.totalorder %s137, %s138
      %p150 = scmp.eq.s32.totalorder %s20, 1
      %p151 = por %p149, %p150
      %p153 = scmp.ne.s32.totalorder %s138, %s152
      %p154 = scmp.eq.s32.totalorder %s20, 0
      %p155 = por %p153, %p154
      %s156 = ssub.s32 %s21, %s33
      %s157 = ssub.s32 %s22, %s29
      %s158 = sor.u32 %s156, %s157
      %p159 = scmp.eq.s32.totalorder %s158, 0
      %s161 = sadd.s32 %s160, 1
      %s162 = scalar_select %p159, %s160, %s161
      %p165 = pneg %p159
      %p166 = scmp.eq.s32.totalorder %s14, 1
      %p167 = por %p165, %p166
      %p168 = scmp.ne.s32.totalorder %s160, %s163
      %p169 = scmp.eq.s32.totalorder %s14, 0
      %p170 = por %p168, %p169
      %p171 = scmp.ne.s32.totalorder %s160, %s163
      %p172 = scmp.eq.s32.totalorder %s19, 1
      %p173 = por %p171, %p172
      %p174 = scmp.ne.s32.totalorder %s163, %s164
      %p175 = scmp.eq.s32.totalorder %s19, 0
      %p176 = por %p174, %p175
      %p177 = scmp.ne.s32.totalorder %s163, %s164
      %p178 = scmp.eq.s32.totalorder %s20, 1
      %p179 = por %p177, %p178
      %p181 = scmp.ne.s32.totalorder %s164, %s180
      %p182 = scmp.eq.s32.totalorder %s20, 0
      %p183 = por %p181, %p182
      %p184 = scmp.le.s32.totalorder 1, %s14
      %p185 = scmp.lt.s32.totalorder %s14, 3
      %p186 = pnand %p184, %p185
      %p187 = pneg %p186
      // Predicated region
      $region9: #{cmha_forward.5} parent=5 // pred_check
        _
      $region10: #{cmha_forward.5} parent=5 // pred_check_branch
        %189 = sbr.rel (%p186) target = $region12
      $region11: #{cmha_forward.5} parent=5 // pred_region
        %s190 = ssub.s32 %s14, 1
        // Predicated region
        $region13: #{cmha_forward.5} parent=11 // pred_check
          %p191 = pneg %p127
        $region14: #{cmha_forward.5} parent=11 // pred_check_branch
          %193 = sbr.rel (%p191) target = $region16
        $region15: #{cmha_forward.5} parent=11 // pred_region
          _
        $region16: #{cmha_forward.5} parent=11 // pred_fallthru
          _
        // Predicated region
        $region17: #{cmha_forward.5} parent=11 // pred_check
          %p194 = pneg %p148
        $region18: #{cmha_forward.5} parent=11 // pred_check_branch
          %196 = sbr.rel (%p194) target = $region20
        $region19: #{cmha_forward.5} parent=11 // pred_region
          _
        $region20: #{cmha_forward.5} parent=11 // pred_fallthru
          _
      $region12: #{cmha_forward.5} parent=5 // pred_fallthru
        _
      %p197 = scmp.lt.s32.totalorder %s14, 2
      // Predicated region
      $region21: #{cmha_forward.5} parent=5 // pred_check
        %p198 = pneg %p197
      $region22: #{cmha_forward.5} parent=5 // pred_check_branch
        %200 = sbr.rel (%p198) target = $region24
      $region23: #{cmha_forward.5} parent=5 // pred_region
        // Predicated region
        $region25: #{cmha_forward.5} parent=23 // pred_check
          %p201 = pneg %p48
        $region26: #{cmha_forward.5} parent=23 // pred_check_branch
          %203 = sbr.rel (%p201) target = $region28
        $region27: #{cmha_forward.5} parent=23 // pred_region
          %p204 = scmp.lt.s32.totalorder %s21, 1
          %s205 = scalar_select %p204, %s21, 1
          %p206 = scmp.lt.s32.totalorder %s22, 0
          %s207 = scalar_select %p206, %s22, 0
          %s208 = sadd.s32 %s207, %s205
          %s209 = smul.addr %s208, 8
          %s210 = scalar_lea.vmem %s0, %s209
        $region28: #{cmha_forward.5} parent=23 // pred_fallthru
          _
        // Predicated region
        $region29: #{cmha_forward.5} parent=23 // pred_check
          %p211 = pneg %p74
        $region30: #{cmha_forward.5} parent=23 // pred_check_branch
          %213 = sbr.rel (%p211) target = $region32
        $region31: #{cmha_forward.5} parent=23 // pred_region
          %p214 = scmp.lt.s32.totalorder %s21, 1
          %s215 = scalar_select %p214, %s21, 1
          %s216 = smul.addr %s215, 8
          %s217 = scalar_lea.vmem %s1, %s216
        $region32: #{cmha_forward.5} parent=23 // pred_fallthru
          _
        // Predicated region
        $region33: #{cmha_forward.5} parent=23 // pred_check
          %p218 = pneg %p100
        $region34: #{cmha_forward.5} parent=23 // pred_check_branch
          %220 = sbr.rel (%p218) target = $region36
        $region35: #{cmha_forward.5} parent=23 // pred_region
          %p221 = scmp.lt.s32.totalorder %s21, 1
          %s222 = scalar_select %p221, %s21, 1
          %s223 = smul.addr %s222, 8
          %s224 = scalar_lea.vmem %s2, %s223
        $region36: #{cmha_forward.5} parent=23 // pred_fallthru
          _
      $region24: #{cmha_forward.5} parent=5 // pred_fallthru
        _
      %p225 = scmp.le.s32.totalorder 1, %s14
      %p226 = scmp.lt.s32.totalorder %s14, 3
      %p227 = pnand %p225, %p226
      %p228 = pneg %p227
      // Predicated region
      $region37: #{cmha_forward.5} parent=5 // pred_check
        _
      $region38: #{cmha_forward.5} parent=5 // pred_check_branch
        %230 = sbr.rel (%p227) target = $region40
      $region39: #{cmha_forward.5} parent=5 // pred_region
        %s231 = ssub.s32 %s14, 1
        %p232 = scmp.lt.s32.totalorder %s23, 1
        %s233 = scalar_select %p232, %s23, 1
        %p234 = scmp.lt.s32.totalorder %s24, 0
        %s235 = scalar_select %p234, %s24, 0
        %s236 = sadd.s32 %s235, %s233
        %s237 = smul.addr %s236, 8
        %s238 = scalar_lea.vmem %s0, %s237
        %p239 = pneg %p54
        %p240 = pneg %p51
        %p241 = scmp.lt.s32.totalorder %s23, 1
        %s242 = scalar_select %p241, %s23, 1
        %s243 = smul.addr %s242, 8
        %s244 = scalar_lea.vmem %s1, %s243
        %p245 = pneg %p80
        %p246 = pneg %p77
        %p247 = scmp.lt.s32.totalorder %s23, 1
        %s248 = scalar_select %p247, %s23, 1
        %s249 = smul.addr %s248, 8
        %s250 = scalar_lea.vmem %s2, %s249
        %p251 = pneg %p106
        %p252 = pneg %p103
        %p253 = pneg %p127
        %p254 = pneg %p124
        %p255 = pneg %p148
        %p256 = pneg %p145
        %p257 = pneg %p176
        %p258 = pneg %p173
        %s259 = sand.u32 %s163, 1
        %s260 = scalar_lea.sflag [#allocation3], %s259
        %s261 = sand.u32 %s163, 1
        %s262 = smul.addr %s261, 8
        %s263 = scalar_lea.vmem [#allocation2], %s262
        %p264 = scmp.lt.s32.totalorder %s23, 1
        %s265 = scalar_select %p264, %s23, 1
        %p266 = scmp.lt.s32.totalorder %s24, 0
        %s267 = scalar_select %p266, %s24, 0
        %s268 = sadd.s32 %s267, %s265
        %s269 = smul.addr %s268, 8
        %s270 = scalar_lea.vmem %s0, %s269
        %p271 = scmp.lt.s32.totalorder %s23, 1
        %s272 = scalar_select %p271, %s23, 1
        %s273 = smul.addr %s272, 8
        %s274 = scalar_lea.vmem %s1, %s273
        %p275 = scmp.lt.s32.totalorder %s23, 1
        %s276 = scalar_select %p275, %s23, 1
        %s277 = smul.addr %s276, 8
        %s278 = scalar_lea.vmem %s2, %s277
        %v279 = vld [vmem:[%s270] sm:$0xff]
        %v280 = vld [vmem:[%s274] sm:$0xff]
        %v281 = vld [vmem:[%s278] sm:$0xff]
        %vm282 = vcmask 64512
        %v284 = vsel %vm282, %v279, 0
        %v287 = vsel %vm282, %v280, 0
        %289 = vmatpush.xpose.msra.mxu0 0.0
        %290 = vmatpush.xpose.msra.mxu0 0.0
        %291 = vmatpush.xpose.msra.mxu0 0.0
        %292 = vmatpush.xpose.msra.mxu0 0.0
        %293 = vmatpush.xpose.msra.mxu0 0.0
        %294 = vmatpush.xpose.msra.mxu0 0.0
        %295 = vmatpush.xpose.msra.mxu0 0.0
        %296 = vmatpush.xpose.msra.mxu0 0.0
        %297 = vmatpush.xpose.msra.mxu0 0.0
        %298 = vmatpush.xpose.msra.mxu0 0.0
        %299 = vmatpush.xpose.msra.mxu0 0.0
        %300 = vmatpush.xpose.msra.mxu0 0.0
        %301 = vmatpush.xpose.msra.mxu0 0.0
        %302 = vmatpush.xpose.msra.mxu0 0.0
        %303 = vmatpush.xpose.msra.mxu0 0.0
        %304 = vmatpush.xpose.msra.mxu0 %v287
        %305 = vmatmul.f32.gmra.mxu0 %v284
        %v306 = vpop.f32.mrf.mxu0
        %v307 = vadd.f32 0.0, %v306
        %308 = vdwg.mxu0
        %v309 = vmul.f32 %v307, 0.35355338
        %v310 = vsel %vm282, %v309, -inf
        %311 = vmax.xlane.f32.xlu0 %v310
        %v312 = vpop.xlane.xlu0 %311
        %v313 = vsub.f32 %v309, %v312
        %v314 = vmul.f32 %v313, 1.442695
        %v315 = vpow.pop %v314
        %v316 = vsel %vm282, %v315, 0.0
        %317 = vadd.xlane.f32.xlu0 %v316
        %v318 = vpop.xlane.xlu0 %317
        %v319 = vrcp.pop %v318
        %v320 = vmul.f32 %v315, %v319
        %v322 = vsel %vm282, %v320, 0
        %324 = vmatpush.msra.mxu0 0.0
        %325 = vmatpush.msra.mxu0 0.0
        %326 = vmatpush.msra.mxu0 0.0
        %327 = vmatpush.msra.mxu0 0.0
        %328 = vmatpush.msra.mxu0 0.0
        %329 = vmatpush.msra.mxu0 0.0
        %330 = vmatpush.msra.mxu0 0.0
        %331 = vmatpush.msra.mxu0 0.0
        %332 = vmatpush.msra.mxu0 0.0
        %333 = vmatpush.msra.mxu0 0.0
        %334 = vmatpush.msra.mxu0 0.0
        %335 = vmatpush.msra.mxu0 0.0
        %336 = vmatpush.msra.mxu0 0.0
        %337 = vmatpush.msra.mxu0 0.0
        %338 = vmatpush.msra.mxu0 0.0
        %339 = vmatpush.msra.mxu0 %v281
        %340 = vmatmul.f32.gmra.mxu0 %v322
        %v341 = vpop.f32.mrf.mxu0
        %v342 = vadd.f32 0.0, %v341
        %343 = vdwg.mxu0
        %344 = vrot.lane.b32.xlu0 %v279, 120
        %v345 = vpop.permute.xlu0 %344
        %346 = vrot.lane.b32.xlu0 %v280, 120
        %v347 = vpop.permute.xlu0 %346
        %v348 = vsel %vm282, %v345, 0
        %v350 = vsel %vm282, %v347, 0
        %352 = vmatpush.xpose.msra.mxu0 0.0
        %353 = vmatpush.xpose.msra.mxu0 0.0
        %354 = vmatpush.xpose.msra.mxu0 0.0
        %355 = vmatpush.xpose.msra.mxu0 0.0
        %356 = vmatpush.xpose.msra.mxu0 0.0
        %357 = vmatpush.xpose.msra.mxu0 0.0
        %358 = vmatpush.xpose.msra.mxu0 0.0
        %359 = vmatpush.xpose.msra.mxu0 0.0
        %360 = vmatpush.xpose.msra.mxu0 0.0
        %361 = vmatpush.xpose.msra.mxu0 0.0
        %362 = vmatpush.xpose.msra.mxu0 0.0
        %363 = vmatpush.xpose.msra.mxu0 0.0
        %364 = vmatpush.xpose.msra.mxu0 0.0
        %365 = vmatpush.xpose.msra.mxu0 0.0
        %366 = vmatpush.xpose.msra.mxu0 0.0
        %367 = vmatpush.xpose.msra.mxu0 %v350
        %368 = vmatmul.f32.gmra.mxu0 %v348
        %v369 = vpop.f32.mrf.mxu0
        %v370 = vadd.f32 0.0, %v369
        %371 = vdwg.mxu0
        %v372 = vmul.f32 %v370, 0.35355338
        %v373 = vsel %vm282, %v372, -inf
        %374 = vmax.xlane.f32.xlu0 %v373
        %v375 = vpop.xlane.xlu0 %374
        %v376 = vsub.f32 %v372, %v375
        %v377 = vmul.f32 %v376, 1.442695
        %v378 = vpow.pop %v377
        %v379 = vsel %vm282, %v378, 0.0
        %380 = vadd.xlane.f32.xlu0 %v379
        %v381 = vpop.xlane.xlu0 %380
        %v382 = vrcp.pop %v381
        %v383 = vmul.f32 %v378, %v382
        %385 = vrot.lane.b32.xlu0 %v281, 120
        %v386 = vpop.permute.xlu0 %385
        %v389 = vsel %vm282, %v383, 0
        %391 = vmatpush.msra.mxu0 0.0
        %392 = vmatpush.msra.mxu0 0.0
        %393 = vmatpush.msra.mxu0 0.0
        %394 = vmatpush.msra.mxu0 0.0
        %395 = vmatpush.msra.mxu0 0.0
        %396 = vmatpush.msra.mxu0 0.0
        %397 = vmatpush.msra.mxu0 0.0
        %398 = vmatpush.msra.mxu0 0.0
        %399 = vmatpush.msra.mxu0 0.0
        %400 = vmatpush.msra.mxu0 0.0
        %401 = vmatpush.msra.mxu0 0.0
        %402 = vmatpush.msra.mxu0 0.0
        %403 = vmatpush.msra.mxu0 0.0
        %404 = vmatpush.msra.mxu0 0.0
        %405 = vmatpush.msra.mxu0 0.0
        %406 = vmatpush.msra.mxu0 %v386
        %407 = vmatmul.f32.gmra.mxu0 %v389
        %v408 = vpop.f32.mrf.mxu0
        %v409 = vadd.f32 0.0, %v408
        %410 = vdwg.mxu0
        %411 = vrot.lane.b32.xlu0 %v279, 112
        %v412 = vpop.permute.xlu0 %411
        %413 = vrot.lane.b32.xlu0 %v280, 112
        %v414 = vpop.permute.xlu0 %413
        %v415 = vsel %vm282, %v412, 0
        %v417 = vsel %vm282, %v414, 0
        %419 = vmatpush.xpose.msra.mxu0 0.0
        %420 = vmatpush.xpose.msra.mxu0 0.0
        %421 = vmatpush.xpose.msra.mxu0 0.0
        %422 = vmatpush.xpose.msra.mxu0 0.0
        %423 = vmatpush.xpose.msra.mxu0 0.0
        %424 = vmatpush.xpose.msra.mxu0 0.0
        %425 = vmatpush.xpose.msra.mxu0 0.0
        %426 = vmatpush.xpose.msra.mxu0 0.0
        %427 = vmatpush.xpose.msra.mxu0 0.0
        %428 = vmatpush.xpose.msra.mxu0 0.0
        %429 = vmatpush.xpose.msra.mxu0 0.0
        %430 = vmatpush.xpose.msra.mxu0 0.0
        %431 = vmatpush.xpose.msra.mxu0 0.0
        %432 = vmatpush.xpose.msra.mxu0 0.0
        %433 = vmatpush.xpose.msra.mxu0 0.0
        %434 = vmatpush.xpose.msra.mxu0 %v417
        %435 = vmatmul.f32.gmra.mxu0 %v415
        %v436 = vpop.f32.mrf.mxu0
        %v437 = vadd.f32 0.0, %v436
        %438 = vdwg.mxu0
        %v439 = vmul.f32 %v437, 0.35355338
        %v440 = vsel %vm282, %v439, -inf
        %441 = vmax.xlane.f32.xlu0 %v440
        %v442 = vpop.xlane.xlu0 %441
        %v443 = vsub.f32 %v439, %v442
        %v444 = vmul.f32 %v443, 1.442695
        %v445 = vpow.pop %v444
        %v446 = vsel %vm282, %v445, 0.0
        %447 = vadd.xlane.f32.xlu0 %v446
        %v448 = vpop.xlane.xlu0 %447
        %v449 = vrcp.pop %v448
        %v450 = vmul.f32 %v445, %v449
        %451 = vrot.lane.b32.xlu0 %v281, 112
        %v452 = vpop.permute.xlu0 %451
        %v455 = vsel %vm282, %v450, 0
        %457 = vmatpush.msra.mxu0 0.0
        %458 = vmatpush.msra.mxu0 0.0
        %459 = vmatpush.msra.mxu0 0.0
        %460 = vmatpush.msra.mxu0 0.0
        %461 = vmatpush.msra.mxu0 0.0
        %462 = vmatpush.msra.mxu0 0.0
        %463 = vmatpush.msra.mxu0 0.0
        %464 = vmatpush.msra.mxu0 0.0
        %465 = vmatpush.msra.mxu0 0.0
        %466 = vmatpush.msra.mxu0 0.0
        %467 = vmatpush.msra.mxu0 0.0
        %468 = vmatpush.msra.mxu0 0.0
        %469 = vmatpush.msra.mxu0 0.0
        %470 = vmatpush.msra.mxu0 0.0
        %471 = vmatpush.msra.mxu0 0.0
        %472 = vmatpush.msra.mxu0 %v452
        %473 = vmatmul.f32.gmra.mxu0 %v455
        %v474 = vpop.f32.mrf.mxu0
        %v475 = vadd.f32 0.0, %v474
        %476 = vdwg.mxu0
        %477 = vrot.lane.b32.xlu0 %v279, 104
        %v478 = vpop.permute.xlu0 %477
        %479 = vrot.lane.b32.xlu0 %v280, 104
        %v480 = vpop.permute.xlu0 %479
        %v481 = vsel %vm282, %v478, 0
        %v483 = vsel %vm282, %v480, 0
        %485 = vmatpush.xpose.msra.mxu0 0.0
        %486 = vmatpush.xpose.msra.mxu0 0.0
        %487 = vmatpush.xpose.msra.mxu0 0.0
        %488 = vmatpush.xpose.msra.mxu0 0.0
        %489 = vmatpush.xpose.msra.mxu0 0.0
        %490 = vmatpush.xpose.msra.mxu0 0.0
        %491 = vmatpush.xpose.msra.mxu0 0.0
        %492 = vmatpush.xpose.msra.mxu0 0.0
        %493 = vmatpush.xpose.msra.mxu0 0.0
        %494 = vmatpush.xpose.msra.mxu0 0.0
        %495 = vmatpush.xpose.msra.mxu0 0.0
        %496 = vmatpush.xpose.msra.mxu0 0.0
        %497 = vmatpush.xpose.msra.mxu0 0.0
        %498 = vmatpush.xpose.msra.mxu0 0.0
        %499 = vmatpush.xpose.msra.mxu0 0.0
        %500 = vmatpush.xpose.msra.mxu0 %v483
        %501 = vmatmul.f32.gmra.mxu0 %v481
        %v502 = vpop.f32.mrf.mxu0
        %v503 = vadd.f32 0.0, %v502
        %504 = vdwg.mxu0
        %v505 = vmul.f32 %v503, 0.35355338
        %v506 = vsel %vm282, %v505, -inf
        %507 = vmax.xlane.f32.xlu0 %v506
        %v508 = vpop.xlane.xlu0 %507
        %v509 = vsub.f32 %v505, %v508
        %v510 = vmul.f32 %v509, 1.442695
        %v511 = vpow.pop %v510
        %v512 = vsel %vm282, %v511, 0.0
        %513 = vadd.xlane.f32.xlu0 %v512
        %v514 = vpop.xlane.xlu0 %513
        %v515 = vrcp.pop %v514
        %v516 = vmul.f32 %v511, %v515
        %517 = vrot.lane.b32.xlu0 %v281, 104
        %v518 = vpop.permute.xlu0 %517
        %v521 = vsel %vm282, %v516, 0
        %523 = vmatpush.msra.mxu0 0.0
        %524 = vmatpush.msra.mxu0 0.0
        %525 = vmatpush.msra.mxu0 0.0
        %526 = vmatpush.msra.mxu0 0.0
        %527 = vmatpush.msra.mxu0 0.0
        %528 = vmatpush.msra.mxu0 0.0
        %529 = vmatpush.msra.mxu0 0.0
        %530 = vmatpush.msra.mxu0 0.0
        %531 = vmatpush.msra.mxu0 0.0
        %532 = vmatpush.msra.mxu0 0.0
        %533 = vmatpush.msra.mxu0 0.0
        %534 = vmatpush.msra.mxu0 0.0
        %535 = vmatpush.msra.mxu0 0.0
        %536 = vmatpush.msra.mxu0 0.0
        %537 = vmatpush.msra.mxu0 0.0
        %538 = vmatpush.msra.mxu0 %v518
        %539 = vmatmul.f32.gmra.mxu0 %v521
        %v540 = vpop.f32.mrf.mxu0
        %v541 = vadd.f32 0.0, %v540
        %542 = vdwg.mxu0
        %544 = vrot.lane.b32.xlu0 %v409, 8
        %v545 = vpop.permute.xlu0 %544
        %548 = vrot.lane.b32.xlu0 %v475, 16
        %v549 = vpop.permute.xlu0 %548
        %552 = vrot.lane.b32.xlu0 %v541, 24
        %v553 = vpop.permute.xlu0 %552
        %v555 = vsel %vm282, %v342, %v545
        %vm556 = vcmask 130048
        %v557 = vsel %vm556, %v555, %v549
        %vm558 = vcmask 195584
        %v559 = vsel %vm558, %v557, %v553
        %v560 = vld [vmem:[%s3] sm:$0xff]
        %v561 = vld [vmem:[%s3 + $0x8] sm:$0xff]
        %v562 = vld [vmem:[%s3 + $0x10] sm:$0xff]
        %v563 = vld [vmem:[%s3 + $0x18] sm:$0xff]
        %v564 = vld [vmem:[%s4] sm:$0x1]
        %v566 = vperm.slane %v564, 0
        %vm568 = vcmask 261120
        %v570 = vsel %vm568, %v559, 0
        %572 = vmatpush.msra.mxu0 0.0
        %573 = vmatpush.msra.mxu0 0.0
        %574 = vmatpush.msra.mxu0 0.0
        %575 = vmatpush.msra.mxu0 0.0
        %576 = vmatpush.msra.mxu0 0.0
        %577 = vmatpush.msra.mxu0 0.0
        %578 = vmatpush.msra.mxu0 0.0
        %579 = vmatpush.msra.mxu0 0.0
        %580 = vmatpush.msra.mxu0 0.0
        %581 = vmatpush.msra.mxu0 0.0
        %582 = vmatpush.msra.mxu0 0.0
        %583 = vmatpush.msra.mxu0 0.0
        %584 = vmatpush.msra.mxu0 %v563
        %585 = vmatpush.msra.mxu0 %v562
        %586 = vmatpush.msra.mxu0 %v561
        %587 = vmatpush.msra.mxu0 %v560
        %588 = vmatmul.f32.gmra.mxu0 %v570
        %v589 = vpop.f32.mrf.mxu0
        %v590 = vadd.f32 %v566, %v589
        %591 = vdwg.mxu0
        %592 = vst.msk [vmem:[%s263] sm:$0xff] %vm568, %v590
        %s593 = sand.u32 %s163, 1
        %s594 = scalar_lea.sflag [#allocation3], %s593
        %s595 = sand.u32 %s163, 1
        %s596 = smul.addr %s595, 8
        %s597 = scalar_lea.vmem [#allocation2], %s596
        // Predicated region
        $region41: #{cmha_forward.5} parent=39 // pred_check
          %p598 = pneg %p173
        $region42: #{cmha_forward.5} parent=39 // pred_check_branch
          %600 = sbr.rel (%p598) target = $region44
        $region43: #{cmha_forward.5} parent=39 // pred_region
          %602 = vsyncadd %s594, 0
          %s603 = sadd.s32 %s24, %s23
          %s604 = smul.addr %s603, 8
          %s605 = scalar_lea.hbm %s5, %s604
          %s607 = sshll.u32 %s597, 4
          %s608 = int_to_ptr.vmem [resolvable:$true] %s607
          %s609 = sshll.u32 %s605, 4
          %s610 = int_to_ptr.hbm [resolvable:$true] %s609
          %612 = dma.vmem_to_hbm [thread:$0]  %s608, 128, %s610, %s594
        $region44: #{cmha_forward.5} parent=39 // pred_fallthru
          _
      $region40: #{cmha_forward.5} parent=5 // pred_fallthru
        _
      %p613 = scmp.le.s32.totalorder 2, %s14
      // Predicated region
      $region45: #{cmha_forward.5} parent=5 // pred_check
        %p614 = pneg %p613
      $region46: #{cmha_forward.5} parent=5 // pred_check_branch
        %616 = sbr.rel (%p614) target = $region48
      $region47: #{cmha_forward.5} parent=5 // pred_region
        %s617 = ssub.s32 %s14, 2
        // Predicated region
        $region49: #{cmha_forward.5} parent=47 // pred_check
          %p618 = pneg %p179
        $region50: #{cmha_forward.5} parent=47 // pred_check_branch
          %620 = sbr.rel (%p618) target = $region52
        $region51: #{cmha_forward.5} parent=47 // pred_region
          %s621 = sand.u32 %s164, 1
          %s622 = scalar_lea.sflag [#allocation3], %s621
          %s623 = sand.u32 %s164, 1
          %s624 = smul.addr %s623, 8
          %s625 = scalar_lea.vmem [#allocation2], %s624
          %627 = dma.done %s622, 128
        $region52: #{cmha_forward.5} parent=47 // pred_fallthru
          _
      $region48: #{cmha_forward.5} parent=5 // pred_fallthru
        _
    $region6: #{cmha_forward.5} parent=1 // loop_footer
      %s18 = sadd.s32 1, %s14
    $region7: #{cmha_forward.5} parent=1 // loop_footer_branch
      %13 = sbr.rel target = $region3
    $region8: #{cmha_forward.5} parent=1 // loop_exit
      _
    %628 = vsyncpa [#allocation3], 1
    %s629 = scalar_lea.sflag [#allocation3], 1
    %630 = vsyncpa %s629, 1

</llo_original>
